<compile_context>
chip_gen: v5e
topology: v5e:2x2
jax: 0.10.0
libtpu: 0.0.40
codegen_flags: <defaults>
</compile_context>

<pallas_src>
import functools

import jax
import jax.numpy as jnp
from jax import lax
from jax.experimental import pallas as pl
from jax.experimental.pallas import tpu as pltpu

BN_EPS = 1e-5


def _round_up(x, m):
    return (x + m - 1) // m * m


def conv_stats_kernel(w_ref, p_ref, y_ref, sum_ref, sq_ref):
    # w_ref: (Co, Kp) bf16, resident across M tiles.  p_ref: (Kp, tm) bf16.
    # y = conv result tile, lane-dense: (Co, tm) with M on the lane axis.
    y = jnp.dot(w_ref[...], p_ref[...], preferred_element_type=jnp.float32)
    y_ref[...] = y
    # Per-channel partial statistics for this tile (lane reduction on the XLU).
    sum_ref[0] = jnp.sum(y, axis=1, keepdims=True)        # (Co, 1)
    sq_ref[0] = jnp.sum(y * y, axis=1, keepdims=True)     # (Co, 1)


def bn_relu_kernel(y_ref, scale_ref, shift_ref, o_ref):
    # Folded BN affine + ReLU: one mul + add + max per element.
    y = y_ref[...]                                         # (Co, tm) f32
    o_ref[...] = jnp.maximum(y * scale_ref[...] + shift_ref[...], 0.0).astype(o_ref.dtype)


def _im2col_t(x, kh, kw, pad, stride):
    """NCHW float32 input -> patches^T of shape [C_in*kh*kw, N*Ho*Wo]."""
    N, C, H, W = x.shape
    xp = jnp.pad(x, ((0, 0), (0, 0), (pad, pad), (pad, pad)))
    Ho = (H + 2 * pad - kh) // stride + 1
    Wo = (W + 2 * pad - kw) // stride + 1
    cols = []
    for di in range(kh):
        for dj in range(kw):
            cols.append(xp[:, :, di:di + stride * Ho:stride, dj:dj + stride * Wo:stride])
    taps = jnp.stack(cols, axis=2)                          # [N, C, kh*kw, Ho, Wo]
    # K-order (C, di, dj) matches PyTorch weight.reshape(C_out, C_in*kh*kw).
    pt = taps.transpose(1, 2, 0, 3, 4).reshape(C * kh * kw, N * Ho * Wo)
    return pt, Ho, Wo


@functools.partial(jax.jit, static_argnames=("kh", "kw", "pad", "stride", "block_m"))
def conv_block_forward(x, weight, bias, gamma, beta, *, kh, kw, pad, stride, block_m=512):
    """x: NCHW. weight: [C_out, C_in, kh, kw] (PyTorch layout). Returns NCHW."""
    del bias  # Conv2d bias is cancelled exactly by training-mode BN mean subtraction.

    N, C_in, H, W = x.shape
    C_out = weight.shape[0]
    K = C_in * kh * kw

    patches_t, Ho, Wo = _im2col_t(x.astype(jnp.float32), kh, kw, pad, stride)
    M = N * Ho * Wo

    # Alignment / tiling.
    Kp = _round_up(K, 128)                     # contraction dim -> full MXU feed, unmasked vld
    Co = _round_up(C_out, 8)                   # sublane alignment
    tm = _round_up(max(128, min(block_m, _round_up(M, 128))), 128)
    Mp = _round_up(M, tm)
    n_tiles = Mp // tm

    # bf16 matmul operands (f32 accumulation on the MXU); zero padding is exact.
    p_bf = jnp.pad(patches_t, ((0, Kp - K), (0, Mp - M))).astype(jnp.bfloat16)
    w_bf = jnp.pad(weight.reshape(C_out, K).astype(jnp.float32),
                   ((0, Co - C_out), (0, Kp - K))).astype(jnp.bfloat16)

    vmem_limit = 32 * 1024 * 1024
    flops1 = 2 * Co * Kp * Mp
    bytes1 = p_bf.size * 2 + w_bf.size * 2 + Co * Mp * 4 + 2 * n_tiles * Co * 4

    # ---- Phase 1: conv matmul (lane-dense output) + per-tile BN partial sums ----
    y, tsum, tsq = pl.pallas_call(
        conv_stats_kernel,
        out_shape=(
            jax.ShapeDtypeStruct((Co, Mp), jnp.float32),
            jax.ShapeDtypeStruct((n_tiles, Co, 1), jnp.float32),
            jax.ShapeDtypeStruct((n_tiles, Co, 1), jnp.float32),
        ),
        grid_spec=pl.GridSpec(
            grid=(n_tiles,),
            in_specs=[
                pl.BlockSpec((Co, Kp), lambda i: (0, 0)),     # weights stay resident
                pl.BlockSpec((Kp, tm), lambda i: (0, i)),     # patches tiled over M
            ],
            out_specs=(
                pl.BlockSpec((Co, tm), lambda i: (0, i)),
                pl.BlockSpec((1, Co, 1), lambda i: (i, 0, 0)),
                pl.BlockSpec((1, Co, 1), lambda i: (i, 0, 0)),
            ),
        ),
        compiler_params=pltpu.CompilerParams(
            dimension_semantics=("parallel",),
            vmem_limit_bytes=vmem_limit),
        cost_estimate=pl.CostEstimate(flops=flops1, transcendentals=0,
                                      bytes_accessed=bytes1),
    )(w_bf, p_bf)

    # ---- Tiny combine in JAX: fold BN into per-channel scale/shift (f32) ----
    inv_m = 1.0 / float(M)                    # divide by true M; zero-padded columns give y==0
    mean = jnp.sum(tsum, axis=0) * inv_m                             # (Co, 1)
    var = jnp.maximum(jnp.sum(tsq, axis=0) * inv_m - mean * mean, 0.0)
    g = jnp.pad(gamma.astype(jnp.float32), (0, Co - C_out)).reshape(Co, 1)
    b = jnp.pad(beta.astype(jnp.float32), (0, Co - C_out)).reshape(Co, 1)
    scale = g * lax.rsqrt(var + BN_EPS)
    shift = b - mean * scale

    # ---- Phase 2: normalize + ReLU, tiled over M ----
    bytes2 = 2 * Co * Mp * 4 + 2 * Co * 4
    out_flat = pl.pallas_call(
        bn_relu_kernel,
        out_shape=jax.ShapeDtypeStruct((Co, Mp), jnp.float32),
        grid_spec=pl.GridSpec(
            grid=(n_tiles,),
            in_specs=[
                pl.BlockSpec((Co, tm), lambda i: (0, i)),
                pl.BlockSpec((Co, 1), lambda i: (0, 0)),
                pl.BlockSpec((Co, 1), lambda i: (0, 0)),
            ],
            out_specs=pl.BlockSpec((Co, tm), lambda i: (0, i)),
        ),
        compiler_params=pltpu.CompilerParams(
            dimension_semantics=("parallel",),
            vmem_limit_bytes=vmem_limit),
        cost_estimate=pl.CostEstimate(flops=3 * Co * Mp, transcendentals=0,
                                      bytes_accessed=bytes2),
    )(y, scale, shift)

    # [Co, Mp] -> [C_out, M] -> NCHW (single boundary transpose for the public API).
    out = out_flat[:C_out, :M].reshape(C_out, N, Ho, Wo).transpose(1, 0, 2, 3)
    return out


def _reference(x, weight, bias, gamma, beta, pad, stride):
    # Reference uses the same bf16 matmul operands (f32 accumulation) as the kernel.
    y = lax.conv_general_dilated(
        x.astype(jnp.bfloat16), weight.astype(jnp.bfloat16),
        window_strides=(stride, stride),
        padding=[(pad, pad), (pad, pad)],
        dimension_numbers=("NCHW", "OIHW", "NCHW"),
        preferred_element_type=jnp.float32)
    y = y + bias.reshape(1, -1, 1, 1)
    mean = jnp.mean(y, axis=(0, 2, 3), keepdims=True)
    var = jnp.mean((y - mean) ** 2, axis=(0, 2, 3), keepdims=True)
    y = (y - mean) * lax.rsqrt(var + BN_EPS)
    y = gamma.reshape(1, -1, 1, 1) * y + beta.reshape(1, -1, 1, 1)
    return jnp.maximum(y, 0.0)


if __name__ == "__main__":
    # ConvBlock(in_channels=4, out_channels=8, kernel_size=3, padding=1)
    N, C_in, H, W = 2, 4, 16, 16
    C_out, kh, kw, pad, stride = 8, 3, 3, 1, 1

    key = jax.random.PRNGKey(0)
    kx, kw_, kb, kg, kbe = jax.random.split(key, 5)
    x = jax.random.normal(kx, (N, C_in, H, W), dtype=jnp.float32)
    weight = jax.random.normal(kw_, (C_out, C_in, kh, kw), dtype=jnp.float32) * 0.1
    bias = jax.random.normal(kb, (C_out,), dtype=jnp.float32) * 0.1
    gamma = 1.0 + 0.1 * jax.random.normal(kg, (C_out,), dtype=jnp.float32)
    beta = 0.1 * jax.random.normal(kbe, (C_out,), dtype=jnp.float32)

    # block_m=256 so the toy shape (M = 2*16*16 = 512) exercises the multi-tile path;
    # use 512-2048 for realistic shapes.
    out = conv_block_forward(x, weight, bias, gamma, beta,
                             kh=kh, kw=kw, pad=pad, stride=stride, block_m=256)
    out = jax.block_until_ready(out)

    ref = _reference(x, weight, bias, gamma, beta, pad, stride)
    assert out.shape == (N, C_out, H, W)
    max_err = float(jnp.max(jnp.abs(out - ref)))
    assert jnp.allclose(out, ref, atol=2e-3, rtol=2e-3), f"max abs err {max_err}"

    print("KERNEL_OK")
</pallas_src>

<mosaic_0001>
module attributes {stable_mosaic.version = 11 : i64} {
  func.func @conv_stats_kernel(%arg0: i32, %arg1: memref<8x128xbf16, #tpu.memory_space<vmem>>, %arg2: memref<128x256xbf16, #tpu.memory_space<vmem>>, %arg3: memref<8x256xf32, #tpu.memory_space<vmem>>, %arg4: memref<1x8x1xf32, #tpu.memory_space<vmem>>, %arg5: memref<1x8x1xf32, #tpu.memory_space<vmem>>) attributes {dimension_semantics = [#tpu.dimension_semantics<parallel>], iteration_bounds = array<i64: 2>, scalar_prefetch = 0 : i64, scratch_operands = 0 : i64, tpu.core_type = #tpu.core_type<tc>, window_params = [{pipeline_mode = #tpu.pipeline_mode<synchronous>, transform_indices = @transform_0, window_bounds = array<i64: 8, 128>}, {transform_indices = @transform_1, window_bounds = array<i64: 128, 256>}, {transform_indices = @transform_2, window_bounds = array<i64: 8, 256>}, {transform_indices = @transform_3, window_bounds = array<i64: 1, 8, 1>}, {transform_indices = @transform_4, window_bounds = array<i64: 1, 8, 1>}]} {
    %c0 = arith.constant 0 : index
    %c0_0 = arith.constant 0 : index
    %0 = vector.load %arg1[%c0, %c0_0] : memref<8x128xbf16, #tpu.memory_space<vmem>>, vector<8x128xbf16>
    %c0_1 = arith.constant 0 : index
    %c0_2 = arith.constant 0 : index
    %1 = vector.load %arg2[%c0_1, %c0_2] : memref<128x256xbf16, #tpu.memory_space<vmem>>, vector<128x256xbf16>
    %cst = arith.constant dense<0.000000e+00> : vector<8x256xf32>
    %2 = tpu.matmul %0, %1, %cst {dimension_numbers = #tpu.dot_dimension_numbers<[1], [0], [0], [1], [0, 0, 1, 1], [], []>} : vector<8x128xbf16>, vector<128x256xbf16>, vector<8x256xf32> -> vector<8x256xf32>
    %c0_3 = arith.constant 0 : index
    %c0_4 = arith.constant 0 : index
    %3 = vector.load %arg3[%c0_3, %c0_4] : memref<8x256xf32, #tpu.memory_space<vmem>>, vector<8x256xf32>
    tpu.vector_store %arg3[%c0_3, %c0_4], %2 {strides = array<i32>} : memref<8x256xf32, #tpu.memory_space<vmem>>, vector<8x256xf32>,
    %cst_5 = arith.constant dense<0.000000e+00> : vector<8xf32>
    %4 = vector.multi_reduction <add>, %2, %cst_5 [1] : vector<8x256xf32> to vector<8xf32>
    %5 = vector.shape_cast %4 : vector<8xf32> to vector<8x1xf32>
    %c0_6 = arith.constant 0 : index
    %c0_7 = arith.constant 0 : index
    %c0_8 = arith.constant 0 : index
    %6 = vector.load %arg4[%c0_6, %c0_7, %c0_8] : memref<1x8x1xf32, #tpu.memory_space<vmem>>, vector<1x8x1xf32>
    %7 = vector.shape_cast %6 : vector<1x8x1xf32> to vector<8x1xf32>
    %8 = vector.shape_cast %5 : vector<8x1xf32> to vector<1x8x1xf32>
    tpu.vector_store %arg4[%c0_6, %c0_7, %c0_8], %8 {strides = array<i32>} : memref<1x8x1xf32, #tpu.memory_space<vmem>>, vector<1x8x1xf32>,
    %9 = arith.mulf %2, %2 : vector<8x256xf32>
    %cst_9 = arith.constant dense<0.000000e+00> : vector<8xf32>
    %10 = vector.multi_reduction <add>, %9, %cst_9 [1] : vector<8x256xf32> to vector<8xf32>
    %11 = vector.shape_cast %10 : vector<8xf32> to vector<8x1xf32>
    %c0_10 = arith.constant 0 : index
    %c0_11 = arith.constant 0 : index
    %c0_12 = arith.constant 0 : index
    %12 = vector.load %arg5[%c0_10, %c0_11, %c0_12] : memref<1x8x1xf32, #tpu.memory_space<vmem>>, vector<1x8x1xf32>
    %13 = vector.shape_cast %12 : vector<1x8x1xf32> to vector<8x1xf32>
    %14 = vector.shape_cast %11 : vector<8x1xf32> to vector<1x8x1xf32>
    tpu.vector_store %arg5[%c0_10, %c0_11, %c0_12], %14 {strides = array<i32>} : memref<1x8x1xf32, #tpu.memory_space<vmem>>, vector<1x8x1xf32>,
    return
  }
  func.func @transform_0(%arg0: i32) -> (i32, i32) {
    %c0_i32 = arith.constant 0 : i32
    %c0_i32_0 = arith.constant 0 : i32
    %c0_i32_1 = arith.constant 0 : i32
    return %c0_i32, %c0_i32_0 : i32, i32
  }
  func.func @transform_1(%arg0: i32) -> (i32, i32) {
    %c0_i32 = arith.constant 0 : i32
    %c0_i32_0 = arith.constant 0 : i32
    return %c0_i32, %arg0 : i32, i32
  }
  func.func @transform_2(%arg0: i32) -> (i32, i32) {
    %c0_i32 = arith.constant 0 : i32
    %c0_i32_0 = arith.constant 0 : i32
    return %c0_i32, %arg0 : i32, i32
  }
  func.func @transform_3(%arg0: i32) -> (i32, i32, i32) {
    %c0_i32 = arith.constant 0 : i32
    %c0_i32_0 = arith.constant 0 : i32
    %c0_i32_1 = arith.constant 0 : i32
    return %arg0, %c0_i32, %c0_i32_0 : i32, i32, i32
  }
  func.func @transform_4(%arg0: i32) -> (i32, i32, i32) {
    %c0_i32 = arith.constant 0 : i32
    %c0_i32_0 = arith.constant 0 : i32
    %c0_i32_1 = arith.constant 0 : i32
    return %arg0, %c0_i32, %c0_i32_0 : i32, i32, i32
  }
}

module attributes {stable_mosaic.version = 11 : i64} {
  func.func @bn_relu_kernel(%arg0: i32, %arg1: memref<8x256xf32, #tpu.memory_space<vmem>>, %arg2: memref<8x1xf32, #tpu.memory_space<vmem>>, %arg3: memref<8x1xf32, #tpu.memory_space<vmem>>, %arg4: memref<8x256xf32, #tpu.memory_space<vmem>>) attributes {dimension_semantics = [#tpu.dimension_semantics<parallel>], iteration_bounds = array<i64: 2>, scalar_prefetch = 0 : i64, scratch_operands = 0 : i64, tpu.core_type = #tpu.core_type<tc>, window_params = [{transform_indices = @transform_0, window_bounds = array<i64: 8, 256>}, {pipeline_mode = #tpu.pipeline_mode<synchronous>, transform_indices = @transform_1, window_bounds = array<i64: 8, 1>}, {pipeline_mode = #tpu.pipeline_mode<synchronous>, transform_indices = @transform_2, window_bounds = array<i64: 8, 1>}, {transform_indices = @transform_3, window_bounds = array<i64: 8, 256>}]} {
    %c0 = arith.constant 0 : index
    %c0_0 = arith.constant 0 : index
    %0 = vector.load %arg1[%c0, %c0_0] : memref<8x256xf32, #tpu.memory_space<vmem>>, vector<8x256xf32>
    %c0_1 = arith.constant 0 : index
    %c0_2 = arith.constant 0 : index
    %1 = vector.load %arg2[%c0_1, %c0_2] : memref<8x1xf32, #tpu.memory_space<vmem>>, vector<8x1xf32>
    %2 = vector.broadcast %1 : vector<8x1xf32> to vector<8x256xf32>
    %3 = arith.mulf %0, %2 : vector<8x256xf32>
    %c0_3 = arith.constant 0 : index
    %c0_4 = arith.constant 0 : index
    %4 = vector.load %arg3[%c0_3, %c0_4] : memref<8x1xf32, #tpu.memory_space<vmem>>, vector<8x1xf32>
    %5 = vector.broadcast %4 : vector<8x1xf32> to vector<8x256xf32>
    %6 = arith.addf %3, %5 : vector<8x256xf32>
    %cst = arith.constant 0.000000e+00 : f32
    %7 = vector.broadcast %cst : f32 to vector<8x256xf32>
    %8 = arith.maximumf %6, %7 : vector<8x256xf32>
    %c0_5 = arith.constant 0 : index
    %c0_6 = arith.constant 0 : index
    %9 = vector.load %arg4[%c0_5, %c0_6] : memref<8x256xf32, #tpu.memory_space<vmem>>, vector<8x256xf32>
    tpu.vector_store %arg4[%c0_5, %c0_6], %8 {strides = array<i32>} : memref<8x256xf32, #tpu.memory_space<vmem>>, vector<8x256xf32>,
    return
  }
  func.func @transform_0(%arg0: i32) -> (i32, i32) {
    %c0_i32 = arith.constant 0 : i32
    %c0_i32_0 = arith.constant 0 : i32
    return %c0_i32, %arg0 : i32, i32
  }
  func.func @transform_1(%arg0: i32) -> (i32, i32) {
    %c0_i32 = arith.constant 0 : i32
    %c0_i32_0 = arith.constant 0 : i32
    %c0_i32_1 = arith.constant 0 : i32
    return %c0_i32, %c0_i32_0 : i32, i32
  }
  func.func @transform_2(%arg0: i32) -> (i32, i32) {
    %c0_i32 = arith.constant 0 : i32
    %c0_i32_0 = arith.constant 0 : i32
    %c0_i32_1 = arith.constant 0 : i32
    return %c0_i32, %c0_i32_0 : i32, i32
  }
  func.func @transform_3(%arg0: i32) -> (i32, i32) {
    %c0_i32 = arith.constant 0 : i32
    %c0_i32_0 = arith.constant 0 : i32
    return %c0_i32, %arg0 : i32, i32
  }
}

</mosaic_0001>

<llo_original>
// kernel: conv_block_forward.3
$region0: #{conv_block_forward.3}
  #allocation0 [shape = 'u32[]', space=smem, size = 0x4, offset = 0x4, fixed_abs, tag = 'smem constant byte address 0x4 - core index']
  #allocation1 [shape = 'u32[72,128]{1,0:T(1,128)}', space=vmem, size = 0x9000, scoped, tag = 'internal scratch']
  %s0 = inlined_call_operand.vmem [shape: f32[8,512], index: 0, kind: input, shape index: {}]
  %s1 = inlined_call_operand.vmem [shape: f32[8,1], index: 1, kind: input, shape index: {}]
  %s2 = inlined_call_operand.vmem [shape: f32[8,1], index: 2, kind: input, shape index: {}]
  %s3 = inlined_call_operand.vmem [shape: f32[8,512], index: 3, kind: output, shape index: {}]
  %s4 = sld [smem:[#allocation0]]
  $region45: #{conv_block_forward.3} parent=0
    _
  %s6 = ssub.s32 1, %s4
  %s7 = scalar_select 0, %s6, %s4
  loop: start=0, step=1, limit=4
  $region2: #{conv_block_forward.3} parent=0 // loop_pre_header
    _
  $region3: #{conv_block_forward.3} parent=0 // loop_header
    %s9 = sphi 0, %s13
    %p10 = scmp.ge.s32.totalorder %s9, 4
    %s19 = sphi 0, %s21
    %s22 = sphi 0, %s19
    %s23 = sphi 0, %s22
    %s39 = sphi 0, %s23
    %s43 = sphi 0, %s43
    %s45 = sphi 0, %s43
    %s46 = sphi 0, %s45
    %s60 = sphi 0, %s46
    %s64 = sphi 0, %s64
    %s66 = sphi 0, %s64
    %s67 = sphi 0, %s66
    %s81 = sphi 0, %s67
    %s87 = sphi 0, %s89
    %s90 = sphi 0, %s87
    %s91 = sphi 0, %s90
    %s107 = sphi 0, %s91
  $region4: #{conv_block_forward.3} parent=0 // loop_header_branch
    %12 = sbr.rel (%p10) target = $region8
  $region5: #{conv_block_forward.3} parent=0 // loop_body
    %s14 = ssub.s32 %s9, 1
    %s15 = ssub.s32 %s9, 2
    %s16 = sadd.s32 %s9, 1
    %s17 = ssub.s32 %s9, %s16
    %p18 = scmp.eq.s32.totalorder %s17, 0
    %s20 = sadd.s32 %s19, 1
    %s21 = scalar_select %p18, %s19, %s20
    %p24 = pneg %p18
    %p25 = scmp.eq.s32.totalorder %s9, 1
    %p26 = por %p24, %p25
    %p27 = scmp.ne.s32.totalorder %s19, %s22
    %p28 = scmp.eq.s32.totalorder %s9, 0
    %p29 = por %p27, %p28
    %p30 = scmp.ne.s32.totalorder %s19, %s22
    %p31 = scmp.eq.s32.totalorder %s14, 1
    %p32 = por %p30, %p31
    %p33 = scmp.ne.s32.totalorder %s22, %s23
    %p34 = scmp.eq.s32.totalorder %s14, 0
    %p35 = por %p33, %p34
    %p36 = scmp.ne.s32.totalorder %s22, %s23
    %p37 = scmp.eq.s32.totalorder %s15, 1
    %p38 = por %p36, %p37
    %p40 = scmp.ne.s32.totalorder %s23, %s39
    %p41 = scmp.eq.s32.totalorder %s15, 0
    %p42 = por %p40, %p41
    %s44 = sadd.s32 %s43, 1
    %p47 = scmp.eq.s32.totalorder %s9, 1
    %p48 = scmp.ne.s32.totalorder %s43, %s45
    %p49 = scmp.eq.s32.totalorder %s9, 0
    %p50 = por %p48, %p49
    %p51 = scmp.ne.s32.totalorder %s43, %s45
    %p52 = scmp.eq.s32.totalorder %s14, 1
    %p53 = por %p51, %p52
    %p54 = scmp.ne.s32.totalorder %s45, %s46
    %p55 = scmp.eq.s32.totalorder %s14, 0
    %p56 = por %p54, %p55
    %p57 = scmp.ne.s32.totalorder %s45, %s46
    %p58 = scmp.eq.s32.totalorder %s15, 1
    %p59 = por %p57, %p58
    %p61 = scmp.ne.s32.totalorder %s46, %s60
    %p62 = scmp.eq.s32.totalorder %s15, 0
    %p63 = por %p61, %p62
    %s65 = sadd.s32 %s64, 1
    %p68 = scmp.eq.s32.totalorder %s9, 1
    %p69 = scmp.ne.s32.totalorder %s64, %s66
    %p70 = scmp.eq.s32.totalorder %s9, 0
    %p71 = por %p69, %p70
    %p72 = scmp.ne.s32.totalorder %s64, %s66
    %p73 = scmp.eq.s32.totalorder %s14, 1
    %p74 = por %p72, %p73
    %p75 = scmp.ne.s32.totalorder %s66, %s67
    %p76 = scmp.eq.s32.totalorder %s14, 0
    %p77 = por %p75, %p76
    %p78 = scmp.ne.s32.totalorder %s66, %s67
    %p79 = scmp.eq.s32.totalorder %s15, 1
    %p80 = por %p78, %p79
    %p82 = scmp.ne.s32.totalorder %s67, %s81
    %p83 = scmp.eq.s32.totalorder %s15, 0
    %p84 = por %p82, %p83
    %s85 = ssub.s32 %s9, %s16
    %p86 = scmp.eq.s32.totalorder %s85, 0
    %s88 = sadd.s32 %s87, 1
    %s89 = scalar_select %p86, %s87, %s88
    %p92 = pneg %p86
    %p93 = scmp.eq.s32.totalorder %s9, 1
    %p94 = por %p92, %p93
    %p95 = scmp.ne.s32.totalorder %s87, %s90
    %p96 = scmp.eq.s32.totalorder %s9, 0
    %p97 = por %p95, %p96
    %p98 = scmp.ne.s32.totalorder %s87, %s90
    %p99 = scmp.eq.s32.totalorder %s14, 1
    %p100 = por %p98, %p99
    %p101 = scmp.ne.s32.totalorder %s90, %s91
    %p102 = scmp.eq.s32.totalorder %s14, 0
    %p103 = por %p101, %p102
    %p104 = scmp.ne.s32.totalorder %s90, %s91
    %p105 = scmp.eq.s32.totalorder %s15, 1
    %p106 = por %p104, %p105
    %p108 = scmp.ne.s32.totalorder %s91, %s107
    %p109 = scmp.eq.s32.totalorder %s15, 0
    %p110 = por %p108, %p109
    %p111 = scmp.le.s32.totalorder 1, %s9
    %p112 = scmp.lt.s32.totalorder %s9, 3
    %p113 = pnand %p111, %p112
    %p114 = pneg %p113
    // Predicated region
    $region9: #{conv_block_forward.3} parent=5 // pred_check
      _
    $region10: #{conv_block_forward.3} parent=5 // pred_check_branch
      %116 = sbr.rel (%p113) target = $region12
    $region11: #{conv_block_forward.3} parent=5 // pred_region
      %s117 = ssub.s32 %s9, 1
      // Predicated region
      $region13: #{conv_block_forward.3} parent=11 // pred_check
        %p118 = pneg %p56
      $region14: #{conv_block_forward.3} parent=11 // pred_check_branch
        %120 = sbr.rel (%p118) target = $region16
      $region15: #{conv_block_forward.3} parent=11 // pred_region
        _
      $region16: #{conv_block_forward.3} parent=11 // pred_fallthru
        _
      // Predicated region
      $region17: #{conv_block_forward.3} parent=11 // pred_check
        %p121 = pneg %p77
      $region18: #{conv_block_forward.3} parent=11 // pred_check_branch
        %123 = sbr.rel (%p121) target = $region20
      $region19: #{conv_block_forward.3} parent=11 // pred_region
        _
      $region20: #{conv_block_forward.3} parent=11 // pred_fallthru
        _
    $region12: #{conv_block_forward.3} parent=5 // pred_fallthru
      _
    %p124 = scmp.lt.s32.totalorder %s9, 2
    // Predicated region
    $region21: #{conv_block_forward.3} parent=5 // pred_check
      %p125 = pneg %p124
    $region22: #{conv_block_forward.3} parent=5 // pred_check_branch
      %127 = sbr.rel (%p125) target = $region24
    $region23: #{conv_block_forward.3} parent=5 // pred_region
      // Predicated region
      $region25: #{conv_block_forward.3} parent=23 // pred_check
        %p128 = pneg %p29
      $region26: #{conv_block_forward.3} parent=23 // pred_check_branch
        %130 = sbr.rel (%p128) target = $region28
      $region27: #{conv_block_forward.3} parent=23 // pred_region
        %s131 = smul.u32 2, %s9
        %p132 = scmp.lt.s32.totalorder %s131, 3
        %s133 = scalar_select %p132, %s131, 3
        %s134 = smul.addr %s133, 8
        %s135 = scalar_lea.vmem %s0, %s134
        %s136 = smul.u32 2, %s9
      $region28: #{conv_block_forward.3} parent=23 // pred_fallthru
        _
    $region24: #{conv_block_forward.3} parent=5 // pred_fallthru
      _
    %p137 = scmp.le.s32.totalorder 1, %s9
    %p138 = scmp.lt.s32.totalorder %s9, 3
    %p139 = pnand %p137, %p138
    %p140 = pneg %p139
    // Predicated region
    $region29: #{conv_block_forward.3} parent=5 // pred_check
      _
    $region30: #{conv_block_forward.3} parent=5 // pred_check_branch
      %142 = sbr.rel (%p139) target = $region32
    $region31: #{conv_block_forward.3} parent=5 // pred_region
      %s143 = ssub.s32 %s9, 1
      %s144 = smul.u32 2, %s14
      %p145 = scmp.lt.s32.totalorder %s144, 3
      %s146 = scalar_select %p145, %s144, 3
      %s147 = smul.addr %s146, 8
      %s148 = scalar_lea.vmem %s0, %s147
      %p149 = pneg %p35
      %p150 = pneg %p32
      %p151 = pneg %p56
      %p152 = pneg %p53
      %p153 = pneg %p77
      %p154 = pneg %p74
      %p155 = pneg %p103
      %p156 = pneg %p100
      %s157 = smul.u32 2, %s14
      %p158 = scmp.lt.s32.totalorder %s157, 3
      %s159 = scalar_select %p158, %s157, 3
      %s160 = smul.addr %s159, 8
      %s161 = scalar_lea.vmem %s3, %s160
      %s162 = smul.u32 2, %s14
      %p163 = scmp.lt.s32.totalorder %s162, 3
      %s164 = scalar_select %p163, %s162, 3
      %s165 = smul.addr %s164, 8
      %s166 = scalar_lea.vmem %s0, %s165
      %s167 = smul.u32 2, %s14
      %s168 = smul.u32 2, %s14
      %p169 = scmp.lt.s32.totalorder %s168, 3
      %s170 = scalar_select %p169, %s168, 3
      %s171 = smul.addr %s170, 8
      %s172 = scalar_lea.vmem %s3, %s171
      %s173 = smul.u32 2, %s14
      %v174 = vld [vmem:[%s166] sm:$0xff]
      %v175 = vld [vmem:[%s166 + $0x8] sm:$0xff]
      %v176 = vld [vmem:[%s1] sm:$0xff]
      %178 = vset.pattern.permute.xlu0 0
      %179 = vperm.xlu0 %178, %v176
      %v180 = vpop.permute.xlu0 %179
      %v182 = vmul.f32 %v174, %v180
      %v183 = vmul.f32 %v175, %v180
      %v184 = vld [vmem:[%s2] sm:$0xff]
      %186 = vset.pattern.permute.xlu0 0
      %187 = vperm.xlu0 %186, %v184
      %v188 = vpop.permute.xlu0 %187
      %v190 = vadd.f32 %v182, %v188
      %v191 = vadd.f32 %v183, %v188
      %v192 = vmax.f32 %v190, 0.0
      %v193 = vmax.f32 %v191, 0.0
      %194 = vst [vmem:[%s172] sm:$0xff] %v192
      %195 = vst [vmem:[%s172 + $0x8] sm:$0xff] %v193
      %s196 = smul.u32 2, %s14
      %p197 = scmp.lt.s32.totalorder %s196, 3
      %s198 = scalar_select %p197, %s196, 3
      %s199 = smul.addr %s198, 8
      %s200 = scalar_lea.vmem %s3, %s199
      // Predicated region
      $region33: #{conv_block_forward.3} parent=31 // pred_check
        %p201 = pneg %p100
      $region34: #{conv_block_forward.3} parent=31 // pred_check_branch
        %203 = sbr.rel (%p201) target = $region36
      $region35: #{conv_block_forward.3} parent=31 // pred_region
        %s204 = smul.u32 2, %s14
      $region36: #{conv_block_forward.3} parent=31 // pred_fallthru
        _
    $region32: #{conv_block_forward.3} parent=5 // pred_fallthru
      _
    %p205 = scmp.le.s32.totalorder 2, %s9
    // Predicated region
    $region37: #{conv_block_forward.3} parent=5 // pred_check
      %p206 = pneg %p205
    $region38: #{conv_block_forward.3} parent=5 // pred_check_branch
      %208 = sbr.rel (%p206) target = $region40
    $region39: #{conv_block_forward.3} parent=5 // pred_region
      %s209 = ssub.s32 %s9, 2
      // Predicated region
      $region41: #{conv_block_forward.3} parent=39 // pred_check
        %p210 = pneg %p106
      $region42: #{conv_block_forward.3} parent=39 // pred_check_branch
        %212 = sbr.rel (%p210) target = $region44
      $region43: #{conv_block_forward.3} parent=39 // pred_region
        %s213 = smul.u32 2, %s15
        %p214 = scmp.lt.s32.totalorder %s213, 3
        %s215 = scalar_select %p214, %s213, 3
        %s216 = smul.addr %s215, 8
        %s217 = scalar_lea.vmem %s3, %s216
      $region44: #{conv_block_forward.3} parent=39 // pred_fallthru
        _
    $region40: #{conv_block_forward.3} parent=5 // pred_fallthru
      _
  $region6: #{conv_block_forward.3} parent=0 // loop_footer
    %s13 = sadd.s32 1, %s9
  $region7: #{conv_block_forward.3} parent=0 // loop_footer_branch
    %8 = sbr.rel target = $region3
  $region8: #{conv_block_forward.3} parent=0 // loop_exit
    _

// kernel: conv_block_forward.2
$region0: #{conv_block_forward.2}
  #allocation0 [shape = 'u32[]', space=smem, size = 0x4, offset = 0x4, fixed_abs, tag = 'smem constant byte address 0x4 - core index']
  #allocation1 [shape = 'u32[72,128]{1,0:T(1,128)}', space=vmem, size = 0x9000, scoped, tag = 'internal scratch']
  %s0 = inlined_call_operand.vmem [shape: bf16[8,128], index: 0, kind: input, shape index: {}]
  %s1 = inlined_call_operand.vmem [shape: bf16[128,512], index: 1, kind: input, shape index: {}]
  %s2 = inlined_call_operand.vmem [shape: f32[8,512], index: 2, kind: output, shape index: {0}]
  %s3 = inlined_call_operand.vmem [shape: f32[2,8,1], index: 3, kind: output, shape index: {1}]
  %s4 = inlined_call_operand.vmem [shape: f32[2,8,1], index: 4, kind: output, shape index: {2}]
  %5 = xla_tuple %s2, %s3, %s4
  %s6 = sld [smem:[#allocation0]]
  $region95: #{conv_block_forward.2} parent=0
    _
  %s8 = ssub.s32 1, %s6
  %s9 = scalar_select 0, %s8, %s6
  $region1: #{conv_block_forward.2} parent=0
    #allocation2 [shape = 'u8[131072]{0}', space=vmem, size = 0x20000, scoped, tag = 'input window, operand 1']
    loop: start=0, step=1, limit=4
    $region2: #{conv_block_forward.2} parent=1 // loop_pre_header
      _
    $region3: #{conv_block_forward.2} parent=1 // loop_header
      %s11 = sphi 0, %s15
      %p12 = scmp.ge.s32.totalorder %s11, 4
      %s19 = sphi 0, %s19
      %s21 = sphi 0, %s19
      %s22 = sphi 0, %s21
      %s36 = sphi 0, %s22
      %s42 = sphi 0, %s44
      %s45 = sphi 0, %s42
      %s46 = sphi 0, %s45
      %s62 = sphi 0, %s46
      %s68 = sphi 0, %s70
      %s71 = sphi 0, %s68
      %s72 = sphi 0, %s71
      %s88 = sphi 0, %s72
      %s94 = sphi 0, %s96
      %s97 = sphi 0, %s94
      %s98 = sphi 0, %s97
      %s114 = sphi 0, %s98
      %s120 = sphi 0, %s122
      %s123 = sphi 0, %s120
      %s124 = sphi 0, %s123
      %s140 = sphi 0, %s124
    $region4: #{conv_block_forward.2} parent=1 // loop_header_branch
      %14 = sbr.rel (%p12) target = $region8
    $region5: #{conv_block_forward.2} parent=1 // loop_body
      %s16 = ssub.s32 %s11, 1
      %s17 = ssub.s32 %s11, 2
      %s18 = sadd.s32 %s11, 1
      %s20 = sadd.s32 %s19, 1
      %p23 = scmp.eq.s32.totalorder %s11, 1
      %p24 = scmp.ne.s32.totalorder %s19, %s21
      %p25 = scmp.eq.s32.totalorder %s11, 0
      %p26 = por %p24, %p25
      %p27 = scmp.ne.s32.totalorder %s19, %s21
      %p28 = scmp.eq.s32.totalorder %s16, 1
      %p29 = por %p27, %p28
      %p30 = scmp.ne.s32.totalorder %s21, %s22
      %p31 = scmp.eq.s32.totalorder %s16, 0
      %p32 = por %p30, %p31
      %p33 = scmp.ne.s32.totalorder %s21, %s22
      %p34 = scmp.eq.s32.totalorder %s17, 1
      %p35 = por %p33, %p34
      %p37 = scmp.ne.s32.totalorder %s22, %s36
      %p38 = scmp.eq.s32.totalorder %s17, 0
      %p39 = por %p37, %p38
      %s40 = ssub.s32 %s11, %s18
      %p41 = scmp.eq.s32.totalorder %s40, 0
      %s43 = sadd.s32 %s42, 1
      %s44 = scalar_select %p41, %s42, %s43
      %p47 = pneg %p41
      %p48 = scmp.eq.s32.totalorder %s11, 1
      %p49 = por %p47, %p48
      %p50 = scmp.ne.s32.totalorder %s42, %s45
      %p51 = scmp.eq.s32.totalorder %s11, 0
      %p52 = por %p50, %p51
      %p53 = scmp.ne.s32.totalorder %s42, %s45
      %p54 = scmp.eq.s32.totalorder %s16, 1
      %p55 = por %p53, %p54
      %p56 = scmp.ne.s32.totalorder %s45, %s46
      %p57 = scmp.eq.s32.totalorder %s16, 0
      %p58 = por %p56, %p57
      %p59 = scmp.ne.s32.totalorder %s45, %s46
      %p60 = scmp.eq.s32.totalorder %s17, 1
      %p61 = por %p59, %p60
      %p63 = scmp.ne.s32.totalorder %s46, %s62
      %p64 = scmp.eq.s32.totalorder %s17, 0
      %p65 = por %p63, %p64
      %s66 = ssub.s32 %s11, %s18
      %p67 = scmp.eq.s32.totalorder %s66, 0
      %s69 = sadd.s32 %s68, 1
      %s70 = scalar_select %p67, %s68, %s69
      %p73 = pneg %p67
      %p74 = scmp.eq.s32.totalorder %s11, 1
      %p75 = por %p73, %p74
      %p76 = scmp.ne.s32.totalorder %s68, %s71
      %p77 = scmp.eq.s32.totalorder %s11, 0
      %p78 = por %p76, %p77
      %p79 = scmp.ne.s32.totalorder %s68, %s71
      %p80 = scmp.eq.s32.totalorder %s16, 1
      %p81 = por %p79, %p80
      %p82 = scmp.ne.s32.totalorder %s71, %s72
      %p83 = scmp.eq.s32.totalorder %s16, 0
      %p84 = por %p82, %p83
      %p85 = scmp.ne.s32.totalorder %s71, %s72
      %p86 = scmp.eq.s32.totalorder %s17, 1
      %p87 = por %p85, %p86
      %p89 = scmp.ne.s32.totalorder %s72, %s88
      %p90 = scmp.eq.s32.totalorder %s17, 0
      %p91 = por %p89, %p90
      %s92 = ssub.s32 %s11, %s18
      %p93 = scmp.eq.s32.totalorder %s92, 0
      %s95 = sadd.s32 %s94, 1
      %s96 = scalar_select %p93, %s94, %s95
      %p99 = pneg %p93
      %p100 = scmp.eq.s32.totalorder %s11, 1
      %p101 = por %p99, %p100
      %p102 = scmp.ne.s32.totalorder %s94, %s97
      %p103 = scmp.eq.s32.totalorder %s11, 0
      %p104 = por %p102, %p103
      %p105 = scmp.ne.s32.totalorder %s94, %s97
      %p106 = scmp.eq.s32.totalorder %s16, 1
      %p107 = por %p105, %p106
      %p108 = scmp.ne.s32.totalorder %s97, %s98
      %p109 = scmp.eq.s32.totalorder %s16, 0
      %p110 = por %p108, %p109
      %p111 = scmp.ne.s32.totalorder %s97, %s98
      %p112 = scmp.eq.s32.totalorder %s17, 1
      %p113 = por %p111, %p112
      %p115 = scmp.ne.s32.totalorder %s98, %s114
      %p116 = scmp.eq.s32.totalorder %s17, 0
      %p117 = por %p115, %p116
      %s118 = ssub.s32 %s11, %s18
      %p119 = scmp.eq.s32.totalorder %s118, 0
      %s121 = sadd.s32 %s120, 1
      %s122 = scalar_select %p119, %s120, %s121
      %p125 = pneg %p119
      %p126 = scmp.eq.s32.totalorder %s11, 1
      %p127 = por %p125, %p126
      %p128 = scmp.ne.s32.totalorder %s120, %s123
      %p129 = scmp.eq.s32.totalorder %s11, 0
      %p130 = por %p128, %p129
      %p131 = scmp.ne.s32.totalorder %s120, %s123
      %p132 = scmp.eq.s32.totalorder %s16, 1
      %p133 = por %p131, %p132
      %p134 = scmp.ne.s32.totalorder %s123, %s124
      %p135 = scmp.eq.s32.totalorder %s16, 0
      %p136 = por %p134, %p135
      %p137 = scmp.ne.s32.totalorder %s123, %s124
      %p138 = scmp.eq.s32.totalorder %s17, 1
      %p139 = por %p137, %p138
      %p141 = scmp.ne.s32.totalorder %s124, %s140
      %p142 = scmp.eq.s32.totalorder %s17, 0
      %p143 = por %p141, %p142
      %p144 = scmp.le.s32.totalorder 1, %s11
      %p145 = scmp.lt.s32.totalorder %s11, 3
      %p146 = pnand %p144, %p145
      %p147 = pneg %p146
      // Predicated region
      $region9: #{conv_block_forward.2} parent=5 // pred_check
        _
      $region10: #{conv_block_forward.2} parent=5 // pred_check_branch
        %149 = sbr.rel (%p146) target = $region12
      $region11: #{conv_block_forward.2} parent=5 // pred_region
        %s150 = ssub.s32 %s11, 1
        // Predicated region
        $region13: #{conv_block_forward.2} parent=11 // pred_check
          %p151 = pneg %p32
        $region14: #{conv_block_forward.2} parent=11 // pred_check_branch
          %153 = sbr.rel (%p151) target = $region16
        $region15: #{conv_block_forward.2} parent=11 // pred_region
          _
        $region16: #{conv_block_forward.2} parent=11 // pred_fallthru
          _
      $region12: #{conv_block_forward.2} parent=5 // pred_fallthru
        _
      %p154 = scmp.lt.s32.totalorder %s11, 2
      // Predicated region
      $region17: #{conv_block_forward.2} parent=5 // pred_check
        %p155 = pneg %p154
      $region18: #{conv_block_forward.2} parent=5 // pred_check_branch
        %157 = sbr.rel (%p155) target = $region20
      $region19: #{conv_block_forward.2} parent=5 // pred_region
        // Predicated region
        $region21: #{conv_block_forward.2} parent=19 // pred_check
          %p158 = pneg %p52
        $region22: #{conv_block_forward.2} parent=19 // pred_check_branch
          %160 = sbr.rel (%p158) target = $region24
        $region23: #{conv_block_forward.2} parent=19 // pred_region
          %s161 = sand.u32 %s42, 1
          %s162 = sand.u32 %s42, 1
          %s163 = smul.addr %s162, 128
          %s164 = scalar_lea.vmem [#allocation2], %s163
          %s165 = smul.u32 2, %s11
          %s166 = smul.addr %s165, 4
          %s167 = scalar_lea.vmem %s1, %s166
          // Predicated region
          $region25: #{conv_block_forward.2} parent=23 // pred_check
            _
          $region26: #{conv_block_forward.2} parent=23 // pred_check_branch
            %169 = sbr.rel (0) target = $region28
          $region27: #{conv_block_forward.2} parent=23 // pred_region
            // Predicated region
            $region29: #{conv_block_forward.2} parent=27 // pred_check
              _
            $region30: #{conv_block_forward.2} parent=27 // pred_check_branch
              %171 = sbr.rel (0) target = $region32
            $region31: #{conv_block_forward.2} parent=27 // pred_region
              // Predicated region
              $region44: #{conv_block_forward.2} parent=31 // pred_check
                _
              $region45: #{conv_block_forward.2} parent=31 // pred_check_branch
                %217 = sbr.rel (0) target = $region47
              $region46: #{conv_block_forward.2} parent=31 // pred_region
                loop: start=0, step=1, limit=1
                $region48: #{conv_block_forward.2} parent=46 // loop_pre_header
                  _
                $region49: #{conv_block_forward.2} parent=46 // loop_header
                  %s219 = sphi 0, %s223
                  %p220 = scmp.ge.s32.totalorder %s219, 1
                  %s224 = sphi %s167, %s167
                  %s225 = sphi %s164, %s164
                $region50: #{conv_block_forward.2} parent=46 // loop_header_branch
                  %222 = sbr.rel (%p220) target = $region54
                $region51: #{conv_block_forward.2} parent=46 // loop_body
                  %v226 = vld [vmem:[%s224] sm:$0xff]
                  %227 = vst [vmem:[%s225] sm:$0xff] %v226
                  %v228 = vld [vmem:[%s224 + $0x10] sm:$0xff]
                  %229 = vst [vmem:[%s225 + $0x8] sm:$0xff] %v228
                  %v230 = vld [vmem:[%s224 + $0x20] sm:$0xff]
                  %231 = vst [vmem:[%s225 + $0x10] sm:$0xff] %v230
                  %v232 = vld [vmem:[%s224 + $0x30] sm:$0xff]
                  %233 = vst [vmem:[%s225 + $0x18] sm:$0xff] %v232
                  %v234 = vld [vmem:[%s224 + $0x40] sm:$0xff]
                  %235 = vst [vmem:[%s225 + $0x20] sm:$0xff] %v234
                  %v236 = vld [vmem:[%s224 + $0x50] sm:$0xff]
                  %237 = vst [vmem:[%s225 + $0x28] sm:$0xff] %v236
                  %v238 = vld [vmem:[%s224 + $0x60] sm:$0xff]
                  %239 = vst [vmem:[%s225 + $0x30] sm:$0xff] %v238
                  %v240 = vld [vmem:[%s224 + $0x70] sm:$0xff]
                  %241 = vst [vmem:[%s225 + $0x38] sm:$0xff] %v240
                  %v242 = vld [vmem:[%s224 + $0x80] sm:$0xff]
                  %243 = vst [vmem:[%s225 + $0x40] sm:$0xff] %v242
                  %v244 = vld [vmem:[%s224 + $0x90] sm:$0xff]
                  %245 = vst [vmem:[%s225 + $0x48] sm:$0xff] %v244
                  %v246 = vld [vmem:[%s224 + $0xa0] sm:$0xff]
                  %247 = vst [vmem:[%s225 + $0x50] sm:$0xff] %v246
                  %v248 = vld [vmem:[%s224 + $0xb0] sm:$0xff]
                  %249 = vst [vmem:[%s225 + $0x58] sm:$0xff] %v248
                  %v250 = vld [vmem:[%s224 + $0xc0] sm:$0xff]
                  %251 = vst [vmem:[%s225 + $0x60] sm:$0xff] %v250
                  %v252 = vld [vmem:[%s224 + $0xd0] sm:$0xff]
                  %253 = vst [vmem:[%s225 + $0x68] sm:$0xff] %v252
                  %v254 = vld [vmem:[%s224 + $0xe0] sm:$0xff]
                  %255 = vst [vmem:[%s225 + $0x70] sm:$0xff] %v254
                  %v256 = vld [vmem:[%s224 + $0xf0] sm:$0xff]
                  %257 = vst [vmem:[%s225 + $0x78] sm:$0xff] %v256
                $region52: #{conv_block_forward.2} parent=46 // loop_footer
                  %s223 = sadd.s32 1, %s219
                $region53: #{conv_block_forward.2} parent=46 // loop_footer_branch
                  %218 = sbr.rel target = $region49
                $region54: #{conv_block_forward.2} parent=46 // loop_exit
                  _
              $region47: #{conv_block_forward.2} parent=31 // pred_fallthru
                _
              // Predicated region
              $region55: #{conv_block_forward.2} parent=31 // pred_check
                _
              $region56: #{conv_block_forward.2} parent=31 // pred_check_branch
                %259 = sbr.rel target = $region58
              $region57: #{conv_block_forward.2} parent=31 // pred_region
                _
              $region58: #{conv_block_forward.2} parent=31 // pred_fallthru
                _
            $region32: #{conv_block_forward.2} parent=27 // pred_fallthru
              _
            // Predicated region
            $region33: #{conv_block_forward.2} parent=27 // pred_check
              _
            $region34: #{conv_block_forward.2} parent=27 // pred_check_branch
              %173 = sbr.rel target = $region36
            $region35: #{conv_block_forward.2} parent=27 // pred_region
              %s175 = ssub.s32 256, 1
              loop: start=0, step=1, limit=1
              $region37: #{conv_block_forward.2} parent=35 // loop_pre_header
                _
              $region38: #{conv_block_forward.2} parent=35 // loop_header
                %s177 = sphi 0, %s181
                %p178 = scmp.ge.s32.totalorder %s177, 1
                %s182 = sphi %s167, %s167
                %s183 = sphi %s164, %s164
              $region39: #{conv_block_forward.2} parent=35 // loop_header_branch
                %180 = sbr.rel (%p178) target = $region43
              $region40: #{conv_block_forward.2} parent=35 // loop_body
                %v184 = vld [vmem:[%s182] sm:%s175]
                %185 = vst [vmem:[%s183] sm:%s175] %v184
                %v186 = vld [vmem:[%s182 + $0x10] sm:%s175]
                %187 = vst [vmem:[%s183 + $0x8] sm:%s175] %v186
                %v188 = vld [vmem:[%s182 + $0x20] sm:%s175]
                %189 = vst [vmem:[%s183 + $0x10] sm:%s175] %v188
                %v190 = vld [vmem:[%s182 + $0x30] sm:%s175]
                %191 = vst [vmem:[%s183 + $0x18] sm:%s175] %v190
                %v192 = vld [vmem:[%s182 + $0x40] sm:%s175]
                %193 = vst [vmem:[%s183 + $0x20] sm:%s175] %v192
                %v194 = vld [vmem:[%s182 + $0x50] sm:%s175]
                %195 = vst [vmem:[%s183 + $0x28] sm:%s175] %v194
                %v196 = vld [vmem:[%s182 + $0x60] sm:%s175]
                %197 = vst [vmem:[%s183 + $0x30] sm:%s175] %v196
                %v198 = vld [vmem:[%s182 + $0x70] sm:%s175]
                %199 = vst [vmem:[%s183 + $0x38] sm:%s175] %v198
                %v200 = vld [vmem:[%s182 + $0x80] sm:%s175]
                %201 = vst [vmem:[%s183 + $0x40] sm:%s175] %v200
                %v202 = vld [vmem:[%s182 + $0x90] sm:%s175]
                %203 = vst [vmem:[%s183 + $0x48] sm:%s175] %v202
                %v204 = vld [vmem:[%s182 + $0xa0] sm:%s175]
                %205 = vst [vmem:[%s183 + $0x50] sm:%s175] %v204
                %v206 = vld [vmem:[%s182 + $0xb0] sm:%s175]
                %207 = vst [vmem:[%s183 + $0x58] sm:%s175] %v206
                %v208 = vld [vmem:[%s182 + $0xc0] sm:%s175]
                %209 = vst [vmem:[%s183 + $0x60] sm:%s175] %v208
                %v210 = vld [vmem:[%s182 + $0xd0] sm:%s175]
                %211 = vst [vmem:[%s183 + $0x68] sm:%s175] %v210
                %v212 = vld [vmem:[%s182 + $0xe0] sm:%s175]
                %213 = vst [vmem:[%s183 + $0x70] sm:%s175] %v212
                %v214 = vld [vmem:[%s182 + $0xf0] sm:%s175]
                %215 = vst [vmem:[%s183 + $0x78] sm:%s175] %v214
              $region41: #{conv_block_forward.2} parent=35 // loop_footer
                %s181 = sadd.s32 1, %s177
              $region42: #{conv_block_forward.2} parent=35 // loop_footer_branch
                %176 = sbr.rel target = $region38
              $region43: #{conv_block_forward.2} parent=35 // loop_exit
                _
            $region36: #{conv_block_forward.2} parent=27 // pred_fallthru
              _
          $region28: #{conv_block_forward.2} parent=23 // pred_fallthru
            _
          %260 = vnop
        $region24: #{conv_block_forward.2} parent=19 // pred_fallthru
          _
      $region20: #{conv_block_forward.2} parent=5 // pred_fallthru
        _
      %p261 = scmp.le.s32.totalorder 1, %s11
      %p262 = scmp.lt.s32.totalorder %s11, 3
      %p263 = pnand %p261, %p262
      %p264 = pneg %p263
      // Predicated region
      $region59: #{conv_block_forward.2} parent=5 // pred_check
        _
      $region60: #{conv_block_forward.2} parent=5 // pred_check_branch
        %266 = sbr.rel (%p263) target = $region62
      $region61: #{conv_block_forward.2} parent=5 // pred_region
        %s267 = ssub.s32 %s11, 1
        %s268 = sand.u32 %s45, 1
        %s269 = sand.u32 %s45, 1
        %s270 = smul.addr %s269, 128
        %s271 = scalar_lea.vmem [#allocation2], %s270
        // Predicated region
        $region63: #{conv_block_forward.2} parent=61 // pred_check
          %p272 = pneg %p58
        $region64: #{conv_block_forward.2} parent=61 // pred_check_branch
          %274 = sbr.rel (%p272) target = $region66
        $region65: #{conv_block_forward.2} parent=61 // pred_region
          _
        $region66: #{conv_block_forward.2} parent=61 // pred_fallthru
          _
        %p275 = pneg %p32
        %p276 = pneg %p29
        %s277 = sand.u32 %s45, 1
        %s278 = sand.u32 %s45, 1
        %s279 = smul.addr %s278, 128
        %s280 = scalar_lea.vmem [#allocation2], %s279
        %p281 = pneg %p58
        %p282 = pneg %p55
        %p283 = pneg %p84
        %p284 = pneg %p81
        %s285 = smul.u32 2, %s16
        %p286 = scmp.lt.s32.totalorder %s285, 3
        %s287 = scalar_select %p286, %s285, 3
        %s288 = smul.addr %s287, 8
        %s289 = scalar_lea.vmem %s2, %s288
        %p290 = pneg %p110
        %p291 = pneg %p107
        %p292 = scmp.lt.s32.totalorder %s16, 1
        %s293 = scalar_select %p292, %s16, 1
        %s294 = smul.addr %s293, 8
        %s295 = scalar_lea.vmem %s3, %s294
        %p296 = pneg %p136
        %p297 = pneg %p133
        %p298 = scmp.lt.s32.totalorder %s16, 1
        %s299 = scalar_select %p298, %s16, 1
        %s300 = smul.addr %s299, 8
        %s301 = scalar_lea.vmem %s4, %s300
        %s302 = smul.u32 2, %s16
        %s303 = smul.u32 2, %s16
        %p304 = scmp.lt.s32.totalorder %s303, 3
        %s305 = scalar_select %p304, %s303, 3
        %s306 = smul.addr %s305, 8
        %s307 = scalar_lea.vmem %s2, %s306
        %s308 = smul.u32 2, %s16
        %p309 = scmp.lt.s32.totalorder %s16, 1
        %s310 = scalar_select %p309, %s16, 1
        %s311 = smul.addr %s310, 8
        %s312 = scalar_lea.vmem %s3, %s311
        %p313 = scmp.lt.s32.totalorder %s16, 1
        %s314 = scalar_select %p313, %s16, 1
        %s315 = smul.addr %s314, 8
        %s316 = scalar_lea.vmem %s4, %s315
        %v317 = vld [vmem:[%s0] sm:$0xf]
        %v318 = vld [vmem:[%s271] sm:$0xff]
        %v319 = vld [vmem:[%s271 + $0x8] sm:$0xff]
        %v320 = vld [vmem:[%s271 + $0x10] sm:$0xff]
        %v321 = vld [vmem:[%s271 + $0x18] sm:$0xff]
        %v322 = vld [vmem:[%s271 + $0x20] sm:$0xff]
        %v323 = vld [vmem:[%s271 + $0x28] sm:$0xff]
        %v324 = vld [vmem:[%s271 + $0x30] sm:$0xff]
        %v325 = vld [vmem:[%s271 + $0x38] sm:$0xff]
        %v326 = vld [vmem:[%s271 + $0x40] sm:$0xff]
        %v327 = vld [vmem:[%s271 + $0x48] sm:$0xff]
        %v328 = vld [vmem:[%s271 + $0x50] sm:$0xff]
        %v329 = vld [vmem:[%s271 + $0x58] sm:$0xff]
        %v330 = vld [vmem:[%s271 + $0x60] sm:$0xff]
        %v331 = vld [vmem:[%s271 + $0x68] sm:$0xff]
        %v332 = vld [vmem:[%s271 + $0x70] sm:$0xff]
        %v333 = vld [vmem:[%s271 + $0x78] sm:$0xff]
        %v350 = vunpack.c.l.b16 %v318
        %v351 = vunpack.c.h.b16 %v318
        %v352 = vunpack.c.l.b16 %v319
        %v353 = vunpack.c.h.b16 %v319
        %v354 = vunpack.c.l.b16 %v320
        %v355 = vunpack.c.h.b16 %v320
        %v356 = vunpack.c.l.b16 %v321
        %v357 = vunpack.c.h.b16 %v321
        %v358 = vunpack.c.l.b16 %v322
        %v359 = vunpack.c.h.b16 %v322
        %v360 = vunpack.c.l.b16 %v323
        %v361 = vunpack.c.h.b16 %v323
        %v362 = vunpack.c.l.b16 %v324
        %v363 = vunpack.c.h.b16 %v324
        %v364 = vunpack.c.l.b16 %v325
        %v365 = vunpack.c.h.b16 %v325
        %v366 = vunpack.c.l.b16 %v326
        %v367 = vunpack.c.h.b16 %v326
        %v368 = vunpack.c.l.b16 %v327
        %v369 = vunpack.c.h.b16 %v327
        %v370 = vunpack.c.l.b16 %v328
        %v371 = vunpack.c.h.b16 %v328
        %v372 = vunpack.c.l.b16 %v329
        %v373 = vunpack.c.h.b16 %v329
        %v374 = vunpack.c.l.b16 %v330
        %v375 = vunpack.c.h.b16 %v330
        %v376 = vunpack.c.l.b16 %v331
        %v377 = vunpack.c.h.b16 %v331
        %v378 = vunpack.c.l.b16 %v332
        %v379 = vunpack.c.h.b16 %v332
        %v380 = vunpack.c.l.b16 %v333
        %v381 = vunpack.c.h.b16 %v333
        %v382 = vpack.c.b16 %v352, %v350
        %v383 = vpack.c.b16 %v353, %v351
        %v384 = vpack.c.b16 %v356, %v354
        %v385 = vpack.c.b16 %v357, %v355
        %v386 = vpack.c.b16 %v360, %v358
        %v387 = vpack.c.b16 %v361, %v359
        %v388 = vpack.c.b16 %v364, %v362
        %v389 = vpack.c.b16 %v365, %v363
        %v390 = vpack.c.b16 %v368, %v366
        %v391 = vpack.c.b16 %v369, %v367
        %v392 = vpack.c.b16 %v372, %v370
        %v393 = vpack.c.b16 %v373, %v371
        %v394 = vpack.c.b16 %v376, %v374
        %v395 = vpack.c.b16 %v377, %v375
        %v396 = vpack.c.b16 %v380, %v378
        %v397 = vpack.c.b16 %v381, %v379
        %414 = vmatpush.bf16.msra.mxu0 %v396
        %415 = vmatpush.bf16.msra.mxu0 %v394
        %416 = vmatpush.bf16.msra.mxu0 %v392
        %417 = vmatpush.bf16.msra.mxu0 %v390
        %418 = vmatpush.bf16.msra.mxu0 %v388
        %419 = vmatpush.bf16.msra.mxu0 %v386
        %420 = vmatpush.bf16.msra.mxu0 %v384
        %421 = vmatpush.bf16.msra.mxu0 %v382
        %422 = vmatmul.bf16.gmra.mxu0 %v317
        %v423 = vpop.f32.mrf.mxu0
        %v424 = vadd.f32 0.0, %v423
        %v425 = vpop.f32.mrf.mxu0
        %426 = vdwg.mxu0
        %427 = vmatpush.bf16.msra.mxu0 %v397
        %428 = vmatpush.bf16.msra.mxu0 %v395
        %429 = vmatpush.bf16.msra.mxu0 %v393
        %430 = vmatpush.bf16.msra.mxu0 %v391
        %431 = vmatpush.bf16.msra.mxu0 %v389
        %432 = vmatpush.bf16.msra.mxu0 %v387
        %433 = vmatpush.bf16.msra.mxu0 %v385
        %434 = vmatpush.bf16.msra.mxu0 %v383
        %435 = vmatmul.bf16.gmra.mxu0 %v317
        %v436 = vpop.f32.mrf.mxu0
        %v437 = vadd.f32 0.0, %v436
        %v438 = vpop.f32.mrf.mxu0
        %439 = vdwg.mxu0
        %440 = vst [vmem:[%s307] sm:$0xff] %v424
        %441 = vst [vmem:[%s307 + $0x8] sm:$0xff] %v437
        %v442 = vadd.f32 %v424, %v437
        %443 = vadd.xlane.f32.xlu0 %v442
        %v444 = vpop.xlane.xlu0 %443
        %vm445 = vcmask 7168
        %446 = vst.msk [vmem:[%s312] sm:$0xff] %vm445, %v444
        %v447 = vmul.f32 %v424, %v424
        %v448 = vmul.f32 %v437, %v437
        %v449 = vadd.f32 %v447, %v448
        %450 = vadd.xlane.f32.xlu0 %v449
        %v451 = vpop.xlane.xlu0 %450
        %452 = vst.msk [vmem:[%s316] sm:$0xff] %vm445, %v451
        %s453 = smul.u32 2, %s16
        %p454 = scmp.lt.s32.totalorder %s453, 3
        %s455 = scalar_select %p454, %s453, 3
        %s456 = smul.addr %s455, 8
        %s457 = scalar_lea.vmem %s2, %s456
        %p458 = scmp.lt.s32.totalorder %s16, 1
        %s459 = scalar_select %p458, %s16, 1
        %s460 = smul.addr %s459, 8
        %s461 = scalar_lea.vmem %s3, %s460
        %p462 = scmp.lt.s32.totalorder %s16, 1
        %s463 = scalar_select %p462, %s16, 1
        %s464 = smul.addr %s463, 8
        %s465 = scalar_lea.vmem %s4, %s464
        // Predicated region
        $region67: #{conv_block_forward.2} parent=61 // pred_check
          %p466 = pneg %p81
        $region68: #{conv_block_forward.2} parent=61 // pred_check_branch
          %468 = sbr.rel (%p466) target = $region70
        $region69: #{conv_block_forward.2} parent=61 // pred_region
          %s469 = smul.u32 2, %s16
        $region70: #{conv_block_forward.2} parent=61 // pred_fallthru
          _
        // Predicated region
        $region71: #{conv_block_forward.2} parent=61 // pred_check
          %p470 = pneg %p107
        $region72: #{conv_block_forward.2} parent=61 // pred_check_branch
          %472 = sbr.rel (%p470) target = $region74
        $region73: #{conv_block_forward.2} parent=61 // pred_region
          _
        $region74: #{conv_block_forward.2} parent=61 // pred_fallthru
          _
        // Predicated region
        $region75: #{conv_block_forward.2} parent=61 // pred_check
          %p473 = pneg %p133
        $region76: #{conv_block_forward.2} parent=61 // pred_check_branch
          %475 = sbr.rel (%p473) target = $region78
        $region77: #{conv_block_forward.2} parent=61 // pred_region
          _
        $region78: #{conv_block_forward.2} parent=61 // pred_fallthru
          _
      $region62: #{conv_block_forward.2} parent=5 // pred_fallthru
        _
      %p476 = scmp.le.s32.totalorder 2, %s11
      // Predicated region
      $region79: #{conv_block_forward.2} parent=5 // pred_check
        %p477 = pneg %p476
      $region80: #{conv_block_forward.2} parent=5 // pred_check_branch
        %479 = sbr.rel (%p477) target = $region82
      $region81: #{conv_block_forward.2} parent=5 // pred_region
        %s480 = ssub.s32 %s11, 2
        // Predicated region
        $region83: #{conv_block_forward.2} parent=81 // pred_check
          %p481 = pneg %p87
        $region84: #{conv_block_forward.2} parent=81 // pred_check_branch
          %483 = sbr.rel (%p481) target = $region86
        $region85: #{conv_block_forward.2} parent=81 // pred_region
          %s484 = smul.u32 2, %s17
          %p485 = scmp.lt.s32.totalorder %s484, 3
          %s486 = scalar_select %p485, %s484, 3
          %s487 = smul.addr %s486, 8
          %s488 = scalar_lea.vmem %s2, %s487
        $region86: #{conv_block_forward.2} parent=81 // pred_fallthru
          _
        // Predicated region
        $region87: #{conv_block_forward.2} parent=81 // pred_check
          %p489 = pneg %p113
        $region88: #{conv_block_forward.2} parent=81 // pred_check_branch
          %491 = sbr.rel (%p489) target = $region90
        $region89: #{conv_block_forward.2} parent=81 // pred_region
          %p492 = scmp.lt.s32.totalorder %s17, 1
          %s493 = scalar_select %p492, %s17, 1
          %s494 = smul.addr %s493, 8
          %s495 = scalar_lea.vmem %s3, %s494
        $region90: #{conv_block_forward.2} parent=81 // pred_fallthru
          _
        // Predicated region
        $region91: #{conv_block_forward.2} parent=81 // pred_check
          %p496 = pneg %p139
        $region92: #{conv_block_forward.2} parent=81 // pred_check_branch
          %498 = sbr.rel (%p496) target = $region94
        $region93: #{conv_block_forward.2} parent=81 // pred_region
          %p499 = scmp.lt.s32.totalorder %s17, 1
          %s500 = scalar_select %p499, %s17, 1
          %s501 = smul.addr %s500, 8
          %s502 = scalar_lea.vmem %s4, %s501
        $region94: #{conv_block_forward.2} parent=81 // pred_fallthru
          _
      $region82: #{conv_block_forward.2} parent=5 // pred_fallthru
        _
    $region6: #{conv_block_forward.2} parent=1 // loop_footer
      %s15 = sadd.s32 1, %s11
    $region7: #{conv_block_forward.2} parent=1 // loop_footer_branch
      %10 = sbr.rel target = $region3
    $region8: #{conv_block_forward.2} parent=1 // loop_exit
      _

</llo_original>
